<compile_context>
chip_gen: v7x
topology: tpu7x:2x2x1
jax: 0.10.0
libtpu: 0.0.40
codegen_flags: <defaults>
</compile_context>

<pallas_src>
import math
import functools

import jax
import jax.numpy as jnp
from jax.experimental import pallas as pl
from jax.experimental.pallas import tpu as pltpu

LANE = 128
SUBLANE = 8


def _round_up(a, b):
    return ((a + b - 1) // b) * b


def _vmem_budget_bytes():
    # Generation-aware budget: ~75% of per-core VMEM, leaving headroom for
    # compiler-internal scratch/semaphores. Falls back to 48 MiB (fits v7x).
    try:
        cap = pltpu.get_tpu_info().vmem_capacity_bytes
    except Exception:
        cap = 64 << 20
    return int(cap * 0.75)


def _support_kernel(x_ref, w_ref, s_ref):
    # support = X @ W, computed exactly once (one pass over X).
    # Output kept bf16 to halve its HBM traffic into stage 2.
    s_ref[...] = jnp.dot(
        x_ref[...].astype(jnp.bfloat16), w_ref[...],
        preferred_element_type=jnp.float32,
    ).astype(s_ref.dtype)


def _aggregate_kernel(adj_ref, s_ref, b_ref, o_ref):
    # out_tile = sum_k adj[i, k] @ support[k, :] + bias
    # The output block is revisited across k -> accumulate directly into it.
    k = pl.program_id(1)

    @pl.when(k == 0)
    def _():
        o_ref[...] = jnp.zeros_like(o_ref)

    # adj is fp32 in HBM; cast the tile on-chip right before the MXU.
    o_ref[...] += jnp.dot(
        adj_ref[...].astype(jnp.bfloat16), s_ref[...],
        preferred_element_type=jnp.float32,
    )

    @pl.when(k == pl.num_programs(1) - 1)
    def _():
        o_ref[...] += b_ref[...]


@functools.partial(jax.jit, static_argnames=("tile_m", "tile_k"))
def graph_convolution(x, adj, weight, bias=None, *, tile_m=1024, tile_k=1024):
    """GCN forward: adj @ (x @ weight) + bias.

    x:      (N, F_in)      float32
    adj:    (N, N)         float32 dense (normalized) adjacency
    weight: (F_in, F_out)  float32
    bias:   (F_out,)       float32 or None
    returns (N, F_out)     float32
    """
    n, f_in = x.shape
    f_out = weight.shape[1]

    # Lane-dense output: pad F_out up to a multiple of 128.
    f_pad = _round_up(f_out, LANE)

    budget = _vmem_budget_bytes()

    # --- sanitize / clamp tiles --------------------------------------------
    # tile_m: sublane dim of fp32 adj & output -> multiple of 8. Keep >= 2 row
    # blocks whenever the graph allows it (v7x has 2 TensorCores to shard the
    # "parallel" row axis across).
    half_rows = _round_up(max((n + 1) // 2, SUBLANE), SUBLANE)
    tile_m = max(SUBLANE, min(_round_up(tile_m, SUBLANE), half_rows))
    # tile_k: lane dim of adj and sublane dim of bf16 support -> mult of 128.
    tile_k = max(LANE, min(_round_up(tile_k, LANE), _round_up(n, LANE)))

    def vmem_need(tm, tk):
        return (2 * tm * tk * 4        # adj fp32 tile, double-buffered
                + 2 * tk * f_pad * 2   # support bf16 tile, double-buffered
                + 2 * tm * f_pad * 4   # output fp32 tile, double-buffered
                + 2 * f_pad * 4)       # bias

    while vmem_need(tile_m, tile_k) > budget and tile_k > LANE:
        tile_k = max(LANE, (tile_k // 2) // LANE * LANE)
    while vmem_need(tile_m, tile_k) > budget and tile_m > SUBLANE:
        tile_m = max(SUBLANE, (tile_m // 2) // SUBLANE * SUBLANE)

    # Per-axis padding: rows to tile_m, K axis to tile_k. Bounded to < 1 tile
    # of waste per axis; no copy at all when n is already tile-aligned.
    n_pad_m = _round_up(n, tile_m)   # adj / output rows
    n_pad_k = _round_up(n, tile_k)   # adj cols, support & x rows

    x_p = x if n_pad_k == n else jnp.pad(x, ((0, n_pad_k - n), (0, 0)))
    adj_p = adj
    if n_pad_m != n or n_pad_k != n:
        adj_p = jnp.pad(adj, ((0, n_pad_m - n), (0, n_pad_k - n)))
    w_p = jnp.zeros((f_in, f_pad), jnp.bfloat16).at[:, :f_out].set(
        weight.astype(jnp.bfloat16))
    b_p = jnp.zeros((1, f_pad), jnp.float32)
    if bias is not None:
        b_p = b_p.at[0, :f_out].set(bias.astype(jnp.float32))

    # ---- Stage 1: support = X @ W (computed once) ---------------------------
    s1_vmem = 2 * (tile_k * f_in * 4 + f_in * f_pad * 2 + tile_k * f_pad * 2)
    support = pl.pallas_call(
        _support_kernel,
        out_shape=jax.ShapeDtypeStruct((n_pad_k, f_pad), jnp.bfloat16),
        grid_spec=pltpu.PrefetchScalarGridSpec(
            num_scalar_prefetch=0,
            grid=(n_pad_k // tile_k,),
            in_specs=[
                pl.BlockSpec((tile_k, f_in), lambda i: (i, 0)),
                pl.BlockSpec((f_in, f_pad), lambda i: (0, 0)),
            ],
            out_specs=pl.BlockSpec((tile_k, f_pad), lambda i: (i, 0)),
        ),
        compiler_params=pltpu.CompilerParams(
            dimension_semantics=("parallel",),
            vmem_limit_bytes=min(budget, max(s1_vmem + (4 << 20), 16 << 20)),
        ),
    )(x_p, w_p)

    # ---- Stage 2: out = adj @ support + bias, K-tiled accumulation ----------
    # Note: pipeline_mode=pl.Buffered(3) on the adj spec is a possible v7x
    # tweak if profiling shows exposed DMA at K-step boundaries.
    out = pl.pallas_call(
        _aggregate_kernel,
        out_shape=jax.ShapeDtypeStruct((n_pad_m, f_pad), jnp.float32),
        grid_spec=pltpu.PrefetchScalarGridSpec(
            num_scalar_prefetch=0,
            grid=(n_pad_m // tile_m, n_pad_k // tile_k),
            in_specs=[
                pl.BlockSpec((tile_m, tile_k), lambda i, k: (i, k)),
                pl.BlockSpec((tile_k, f_pad), lambda i, k: (k, 0)),
                pl.BlockSpec((1, f_pad), lambda i, k: (0, 0)),
            ],
            out_specs=pl.BlockSpec((tile_m, f_pad), lambda i, k: (i, 0)),
        ),
        compiler_params=pltpu.CompilerParams(
            dimension_semantics=("parallel", "arbitrary"),
            vmem_limit_bytes=min(
                budget, max(vmem_need(tile_m, tile_k) + (4 << 20), 32 << 20)),
        ),
    )(adj_p, support, b_p)

    return out[:n, :f_out]


def reference(x, adj, weight, bias):
    return adj @ (x @ weight) + bias[None, :]


if __name__ == "__main__":
    # Small deterministic problem: N=128 nodes, F_in=32, F_out=16.
    N, F_IN, F_OUT = 128, 32, 16

    key = jax.random.PRNGKey(0)
    k_x, k_adj, k_w, k_b = jax.random.split(key, 4)

    x = jax.random.normal(k_x, (N, F_IN), dtype=jnp.float32)

    # Simple symmetric row-normalized dense "adjacency".
    raw = (jax.random.uniform(k_adj, (N, N)) < 0.1).astype(jnp.float32)
    adj = raw + raw.T + jnp.eye(N, dtype=jnp.float32)
    deg = jnp.clip(adj.sum(axis=1, keepdims=True), 1.0, None)
    adj = adj / deg

    # Parameter init matching reset_parameters(): U(-stdv, stdv), stdv = 1/sqrt(F_out)
    stdv = 1.0 / math.sqrt(F_OUT)
    weight = jax.random.uniform(k_w, (F_IN, F_OUT), minval=-stdv, maxval=stdv,
                                dtype=jnp.float32)
    bias = jax.random.uniform(k_b, (F_OUT,), minval=-stdv, maxval=stdv,
                              dtype=jnp.float32)

    out = graph_convolution(x, adj, weight, bias)
    jax.block_until_ready(out)

    ref = reference(x, adj, weight, bias)
    assert out.shape == (N, F_OUT)
    # bf16 MXU inputs with fp32 accumulation -> loose-ish tolerance vs fp32 ref.
    assert jnp.allclose(out, ref, atol=2e-2, rtol=2e-2), "mismatch vs reference"

    print("KERNEL_OK")
</pallas_src>

<mosaic_0001>
module attributes {stable_mosaic.version = 11 : i64} {
  func.func @_support_kernel(%arg0: i32, %arg1: memref<128x32xf32, #tpu.memory_space<vmem>>, %arg2: memref<32x128xbf16, #tpu.memory_space<vmem>>, %arg3: memref<128x128xbf16, #tpu.memory_space<vmem>>) attributes {dimension_semantics = [#tpu.dimension_semantics<parallel>], iteration_bounds = array<i64: 1>, scalar_prefetch = 0 : i64, scratch_operands = 0 : i64, tpu.core_type = #tpu.core_type<tc>, window_params = [{transform_indices = @transform_0, window_bounds = array<i64: 128, 32>}, {pipeline_mode = #tpu.pipeline_mode<synchronous>, transform_indices = @transform_1, window_bounds = array<i64: 32, 128>}, {transform_indices = @transform_2, window_bounds = array<i64: 128, 128>}]} {
    %c0 = arith.constant 0 : index
    %c0_0 = arith.constant 0 : index
    %0 = vector.load %arg1[%c0, %c0_0] : memref<128x32xf32, #tpu.memory_space<vmem>>, vector<128x32xf32>
    %1 = arith.truncf %0 : vector<128x32xf32> to vector<128x32xbf16>
    %c0_1 = arith.constant 0 : index
    %c0_2 = arith.constant 0 : index
    %2 = vector.load %arg2[%c0_1, %c0_2] : memref<32x128xbf16, #tpu.memory_space<vmem>>, vector<32x128xbf16>
    %cst = arith.constant dense<0.000000e+00> : vector<128x128xf32>
    %3 = tpu.matmul %1, %2, %cst {dimension_numbers = #tpu.dot_dimension_numbers<[1], [0], [0], [1], [0, 0, 1, 1], [], []>} : vector<128x32xbf16>, vector<32x128xbf16>, vector<128x128xf32> -> vector<128x128xf32>
    %4 = arith.truncf %3 : vector<128x128xf32> to vector<128x128xbf16>
    %c0_3 = arith.constant 0 : index
    %c0_4 = arith.constant 0 : index
    %5 = vector.load %arg3[%c0_3, %c0_4] : memref<128x128xbf16, #tpu.memory_space<vmem>>, vector<128x128xbf16>
    tpu.vector_store %arg3[%c0_3, %c0_4], %4 {strides = array<i32>} : memref<128x128xbf16, #tpu.memory_space<vmem>>, vector<128x128xbf16>,
    return
  }
  func.func @transform_0(%arg0: i32) -> (i32, i32) {
    %c0_i32 = arith.constant 0 : i32
    %c0_i32_0 = arith.constant 0 : i32
    return %arg0, %c0_i32 : i32, i32
  }
  func.func @transform_1(%arg0: i32) -> (i32, i32) {
    %c0_i32 = arith.constant 0 : i32
    %c0_i32_0 = arith.constant 0 : i32
    %c0_i32_1 = arith.constant 0 : i32
    return %c0_i32, %c0_i32_0 : i32, i32
  }
  func.func @transform_2(%arg0: i32) -> (i32, i32) {
    %c0_i32 = arith.constant 0 : i32
    %c0_i32_0 = arith.constant 0 : i32
    return %arg0, %c0_i32 : i32, i32
  }
}

module attributes {stable_mosaic.version = 11 : i64} {
  func.func @_aggregate_kernel(%arg0: i32, %arg1: i32, %arg2: memref<64x128xf32, #tpu.memory_space<vmem>>, %arg3: memref<128x128xbf16, #tpu.memory_space<vmem>>, %arg4: memref<1x128xf32, #tpu.memory_space<vmem>>, %arg5: memref<64x128xf32, #tpu.memory_space<vmem>>) attributes {dimension_semantics = [#tpu.dimension_semantics<parallel>, #tpu.dimension_semantics<arbitrary>], iteration_bounds = array<i64: 2, 1>, scalar_prefetch = 0 : i64, scratch_operands = 0 : i64, tpu.core_type = #tpu.core_type<tc>, window_params = [{transform_indices = @transform_0, window_bounds = array<i64: 64, 128>}, {transform_indices = @transform_1, window_bounds = array<i64: 128, 128>}, {pipeline_mode = #tpu.pipeline_mode<synchronous>, transform_indices = @transform_2, window_bounds = array<i64: 1, 128>}, {transform_indices = @transform_3, window_bounds = array<i64: 64, 128>}]} {
    %c0_i32 = arith.constant 0 : i32
    %0 = arith.cmpi eq, %arg1, %c0_i32 : i32
    %1 = arith.extui %0 : i1 to i32
    %c0_i32_0 = arith.constant 0 : i32
    %2 = arith.cmpi ne, %1, %c0_i32_0 : i32
    scf.if %2 {
      %cst_10 = arith.constant 0.000000e+00 : f32
      %13 = vector.broadcast %cst_10 : f32 to vector<64x128xf32>
      %c0_11 = arith.constant 0 : index
      %c0_12 = arith.constant 0 : index
      %14 = vector.load %arg5[%c0_11, %c0_12] : memref<64x128xf32, #tpu.memory_space<vmem>>, vector<64x128xf32>
      tpu.vector_store %arg5[%c0_11, %c0_12], %13 {strides = array<i32>} : memref<64x128xf32, #tpu.memory_space<vmem>>, vector<64x128xf32>,
    } else {
    }
    %c0 = arith.constant 0 : index
    %c0_1 = arith.constant 0 : index
    %3 = vector.load %arg5[%c0, %c0_1] : memref<64x128xf32, #tpu.memory_space<vmem>>, vector<64x128xf32>
    %c0_2 = arith.constant 0 : index
    %c0_3 = arith.constant 0 : index
    %4 = vector.load %arg2[%c0_2, %c0_3] : memref<64x128xf32, #tpu.memory_space<vmem>>, vector<64x128xf32>
    %5 = arith.truncf %4 : vector<64x128xf32> to vector<64x128xbf16>
    %c0_4 = arith.constant 0 : index
    %c0_5 = arith.constant 0 : index
    %6 = vector.load %arg3[%c0_4, %c0_5] : memref<128x128xbf16, #tpu.memory_space<vmem>>, vector<128x128xbf16>
    %cst = arith.constant dense<0.000000e+00> : vector<64x128xf32>
    %7 = tpu.matmul %5, %6, %cst {dimension_numbers = #tpu.dot_dimension_numbers<[1], [0], [0], [1], [0, 0, 1, 1], [], []>} : vector<64x128xbf16>, vector<128x128xbf16>, vector<64x128xf32> -> vector<64x128xf32>
    %8 = arith.addf %3, %7 : vector<64x128xf32>
    %c0_6 = arith.constant 0 : index
    %c0_7 = arith.constant 0 : index
    %9 = vector.load %arg5[%c0_6, %c0_7] : memref<64x128xf32, #tpu.memory_space<vmem>>, vector<64x128xf32>
    tpu.vector_store %arg5[%c0_6, %c0_7], %8 {strides = array<i32>} : memref<64x128xf32, #tpu.memory_space<vmem>>, vector<64x128xf32>,
    %c0_i32_8 = arith.constant 0 : i32
    %10 = arith.cmpi eq, %arg1, %c0_i32_8 : i32
    %11 = arith.extui %10 : i1 to i32
    %c0_i32_9 = arith.constant 0 : i32
    %12 = arith.cmpi ne, %11, %c0_i32_9 : i32
    scf.if %12 {
      %c0_10 = arith.constant 0 : index
      %c0_11 = arith.constant 0 : index
      %13 = vector.load %arg5[%c0_10, %c0_11] : memref<64x128xf32, #tpu.memory_space<vmem>>, vector<64x128xf32>
      %c0_12 = arith.constant 0 : index
      %c0_13 = arith.constant 0 : index
      %14 = vector.load %arg4[%c0_12, %c0_13] : memref<1x128xf32, #tpu.memory_space<vmem>>, vector<1x128xf32>
      %15 = vector.broadcast %14 : vector<1x128xf32> to vector<64x128xf32>
      %16 = arith.addf %13, %15 : vector<64x128xf32>
      %c0_14 = arith.constant 0 : index
      %c0_15 = arith.constant 0 : index
      %17 = vector.load %arg5[%c0_14, %c0_15] : memref<64x128xf32, #tpu.memory_space<vmem>>, vector<64x128xf32>
      tpu.vector_store %arg5[%c0_14, %c0_15], %16 {strides = array<i32>} : memref<64x128xf32, #tpu.memory_space<vmem>>, vector<64x128xf32>,
    } else {
    }
    return
  }
  func.func @transform_0(%arg0: i32, %arg1: i32) -> (i32, i32) {
    %c0_i32 = arith.constant 0 : i32
    return %arg0, %arg1 : i32, i32
  }
  func.func @transform_1(%arg0: i32, %arg1: i32) -> (i32, i32) {
    %c0_i32 = arith.constant 0 : i32
    %c0_i32_0 = arith.constant 0 : i32
    return %arg1, %c0_i32 : i32, i32
  }
  func.func @transform_2(%arg0: i32, %arg1: i32) -> (i32, i32) {
    %c0_i32 = arith.constant 0 : i32
    %c0_i32_0 = arith.constant 0 : i32
    %c0_i32_1 = arith.constant 0 : i32
    return %c0_i32, %c0_i32_0 : i32, i32
  }
  func.func @transform_3(%arg0: i32, %arg1: i32) -> (i32, i32) {
    %c0_i32 = arith.constant 0 : i32
    %c0_i32_0 = arith.constant 0 : i32
    return %arg0, %c0_i32 : i32, i32
  }
}

</mosaic_0001>

<llo_original>
// kernel: graph_convolution.2
$region0: #{graph_convolution.2}
  #allocation0 [shape = 'u32[]', space=smem, size = 0x4, offset = 0x4, fixed_abs, tag = 'smem constant byte address 0x4 - core index']
  #allocation1 [shape = 'u32[144,128]{1,0:T(1,128)}', space=vmem, size = 0x12000, scoped, tag = 'internal scratch']
  %s0 = inlined_call_operand.vmem [shape: f32[128,32], index: 0, kind: input, shape index: {}]
  %s1 = inlined_call_operand.vmem [shape: bf16[32,128], index: 1, kind: input, shape index: {}]
  %s2 = inlined_call_operand.vmem [shape: bf16[128,128], index: 2, kind: output, shape index: {}]
  %s3 = sld [smem:[#allocation0]]
  $region18: #{graph_convolution.2} parent=0
    _
  %s5 = ssub.s32 1, %s3
  %s6 = scalar_select 0, %s5, %s3
  // Predicated region
  $region2: #{graph_convolution.2} parent=0 // pred_check
    _
  $region3: #{graph_convolution.2} parent=0 // pred_check_branch
    %8 = sbr.rel (0) target = $region5
  $region4: #{graph_convolution.2} parent=0 // pred_region
    _
  $region5: #{graph_convolution.2} parent=0 // pred_fallthru
    _
  // Predicated region
  $region6: #{graph_convolution.2} parent=0 // pred_check
    _
  $region7: #{graph_convolution.2} parent=0 // pred_check_branch
    %10 = sbr.rel (0) target = $region9
  $region8: #{graph_convolution.2} parent=0 // pred_region
    _
  $region9: #{graph_convolution.2} parent=0 // pred_fallthru
    _
  %v12 = vld [vmem:[%s0] sm:$0xff]
  %v13 = vld [vmem:[%s0 + $0x8] sm:$0xff]
  %v14 = vld [vmem:[%s0 + $0x10] sm:$0xff]
  %v15 = vld [vmem:[%s0 + $0x18] sm:$0xff]
  %v16 = vld [vmem:[%s0 + $0x20] sm:$0xff]
  %v17 = vld [vmem:[%s0 + $0x28] sm:$0xff]
  %v18 = vld [vmem:[%s0 + $0x30] sm:$0xff]
  %v19 = vld [vmem:[%s0 + $0x38] sm:$0xff]
  %v20 = vld [vmem:[%s0 + $0x40] sm:$0xff]
  %v21 = vld [vmem:[%s0 + $0x48] sm:$0xff]
  %v22 = vld [vmem:[%s0 + $0x50] sm:$0xff]
  %v23 = vld [vmem:[%s0 + $0x58] sm:$0xff]
  %v24 = vld [vmem:[%s0 + $0x60] sm:$0xff]
  %v25 = vld [vmem:[%s0 + $0x68] sm:$0xff]
  %v26 = vld [vmem:[%s0 + $0x70] sm:$0xff]
  %v27 = vld [vmem:[%s0 + $0x78] sm:$0xff]
  %v28 = vpack.c.bf16 %v13, %v12
  %v29 = vpack.c.bf16 %v15, %v14
  %v30 = vpack.c.bf16 %v17, %v16
  %v31 = vpack.c.bf16 %v19, %v18
  %v32 = vpack.c.bf16 %v21, %v20
  %v33 = vpack.c.bf16 %v23, %v22
  %v34 = vpack.c.bf16 %v25, %v24
  %v35 = vpack.c.bf16 %v27, %v26
  %v36 = vld [vmem:[%s1] sm:$0xf]
  %v37 = vld [vmem:[%s1 + $0x4] sm:$0xf]
  %v38 = vld [vmem:[%s1 + $0x8] sm:$0xf]
  %v39 = vld [vmem:[%s1 + $0xc] sm:$0xf]
  %v44 = vunpack.c.l.b16 %v36
  %v45 = vunpack.c.l.b16 %v37
  %v46 = vunpack.c.l.b16 %v38
  %v47 = vunpack.c.l.b16 %v39
  %v48 = vpack.c.b16 %v45, %v44
  %v49 = vpack.c.b16 %v47, %v46
  %vm52 = vcmask 261120
  %v54 = vsel %vm52, %v28, 0
  %v57 = vsel %vm52, %v29, 0
  %v60 = vsel %vm52, %v30, 0
  %v63 = vsel %vm52, %v31, 0
  %v66 = vsel %vm52, %v32, 0
  %v69 = vsel %vm52, %v33, 0
  %v72 = vsel %vm52, %v34, 0
  %v75 = vsel %vm52, %v35, 0
  %77 = vmatprep.subr.bf16.mxu0 0
  %78 = vmatpush1.bf16.msra.mxu0 %v48
  %79 = vmatprep.subr.bf16.mxu0 0
  %80 = vmatpush1.bf16.msra.mxu0 %v49
  %81 = vmatprep.subr.bf16.mxu0 0
  %82 = vmatpush1.bf16.msra.mxu0 0
  %83 = vmatprep.subr.bf16.mxu0 0
  %84 = vmatpush1.bf16.msra.mxu0 0
  %85 = vmatprep.subr.bf16.mxu0 0
  %86 = vmatpush1.bf16.msra.mxu0 0
  %87 = vmatprep.subr.bf16.mxu0 0
  %88 = vmatpush1.bf16.msra.mxu0 0
  %89 = vmatprep.subr.bf16.mxu0 0
  %90 = vmatpush1.bf16.msra.mxu0 0
  %91 = vmatprep.subr.bf16.mxu0 0
  %92 = vmatpush1.bf16.msra.mxu0 0
  %93 = vmatprep.subr.bf16.mxu0 0
  %94 = vmatpush1.bf16.msra.mxu0 0
  %95 = vmatprep.subr.bf16.mxu0 0
  %96 = vmatpush1.bf16.msra.mxu0 0
  %97 = vmatprep.subr.bf16.mxu0 0
  %98 = vmatpush1.bf16.msra.mxu0 0
  %99 = vmatprep.subr.bf16.mxu0 0
  %100 = vmatpush1.bf16.msra.mxu0 0
  %101 = vmatprep.subr.bf16.mxu0 0
  %102 = vmatpush1.bf16.msra.mxu0 0
  %103 = vmatprep.subr.bf16.mxu0 0
  %104 = vmatpush1.bf16.msra.mxu0 0
  %105 = vmatprep.subr.bf16.mxu0 0
  %106 = vmatpush1.bf16.msra.mxu0 0
  %107 = vmatprep.subr.bf16.mxu0 0
  %108 = vmatpush1.bf16.msra.mxu0 0
  %109 = vmatprep.mubr.bf16.mxu0 0
  %110 = vmatmul.mubr.bf16.gmra.mrb[0].mxu0 %v54
  %v111 = vpop.f32.mrb[0].mxu0
  %v112 = vadd.f32 0.0, %v111
  %v113 = vpop.f32.mrb[0].mxu0
  %v114 = vpop.f32.mrb[0].mxu0
  %v115 = vadd.f32 0.0, %v114
  %v116 = vpop.f32.mrb[0].mxu0
  %117 = vmatprep.mubr.bf16.mxu0 0
  %118 = vmatmul.mubr.bf16.gmra.mrb[0].mxu0 %v57
  %v119 = vpop.f32.mrb[0].mxu0
  %v120 = vadd.f32 0.0, %v119
  %v121 = vpop.f32.mrb[0].mxu0
  %v122 = vpop.f32.mrb[0].mxu0
  %v123 = vadd.f32 0.0, %v122
  %v124 = vpop.f32.mrb[0].mxu0
  %125 = vmatprep.mubr.bf16.mxu0 0
  %126 = vmatmul.mubr.bf16.gmra.mrb[0].mxu0 %v60
  %v127 = vpop.f32.mrb[0].mxu0
  %v128 = vadd.f32 0.0, %v127
  %v129 = vpop.f32.mrb[0].mxu0
  %v130 = vpop.f32.mrb[0].mxu0
  %v131 = vadd.f32 0.0, %v130
  %v132 = vpop.f32.mrb[0].mxu0
  %133 = vmatprep.mubr.bf16.mxu0 0
  %134 = vmatmul.mubr.bf16.gmra.mrb[0].mxu0 %v63
  %v135 = vpop.f32.mrb[0].mxu0
  %v136 = vadd.f32 0.0, %v135
  %v137 = vpop.f32.mrb[0].mxu0
  %v138 = vpop.f32.mrb[0].mxu0
  %v139 = vadd.f32 0.0, %v138
  %v140 = vpop.f32.mrb[0].mxu0
  %141 = vmatprep.mubr.bf16.mxu0 0
  %142 = vmatmul.mubr.bf16.gmra.mrb[0].mxu0 %v66
  %v143 = vpop.f32.mrb[0].mxu0
  %v144 = vadd.f32 0.0, %v143
  %v145 = vpop.f32.mrb[0].mxu0
  %v146 = vpop.f32.mrb[0].mxu0
  %v147 = vadd.f32 0.0, %v146
  %v148 = vpop.f32.mrb[0].mxu0
  %149 = vmatprep.mubr.bf16.mxu0 0
  %150 = vmatmul.mubr.bf16.gmra.mrb[0].mxu0 %v69
  %v151 = vpop.f32.mrb[0].mxu0
  %v152 = vadd.f32 0.0, %v151
  %v153 = vpop.f32.mrb[0].mxu0
  %v154 = vpop.f32.mrb[0].mxu0
  %v155 = vadd.f32 0.0, %v154
  %v156 = vpop.f32.mrb[0].mxu0
  %157 = vmatprep.mubr.bf16.mxu0 0
  %158 = vmatmul.mubr.bf16.gmra.mrb[0].mxu0 %v72
  %v159 = vpop.f32.mrb[0].mxu0
  %v160 = vadd.f32 0.0, %v159
  %v161 = vpop.f32.mrb[0].mxu0
  %v162 = vpop.f32.mrb[0].mxu0
  %v163 = vadd.f32 0.0, %v162
  %v164 = vpop.f32.mrb[0].mxu0
  %165 = vmatprep.mubr.bf16.mxu0 0
  %166 = vmatmul.mubr.bf16.gmra.mrb[0].mxu0 %v75
  %v167 = vpop.f32.mrb[0].mxu0
  %v168 = vadd.f32 0.0, %v167
  %v169 = vpop.f32.mrb[0].mxu0
  %v170 = vpop.f32.mrb[0].mxu0
  %v171 = vadd.f32 0.0, %v170
  %v172 = vpop.f32.mrb[0].mxu0
  %173 = vdwg.mxu0
  %v174 = vpack.c.bf16 %v115, %v112
  %v175 = vpack.c.bf16 %v123, %v120
  %v176 = vpack.c.bf16 %v131, %v128
  %v177 = vpack.c.bf16 %v139, %v136
  %v178 = vpack.c.bf16 %v147, %v144
  %v179 = vpack.c.bf16 %v155, %v152
  %v180 = vpack.c.bf16 %v163, %v160
  %v181 = vpack.c.bf16 %v171, %v168
  %v190 = vunpack.c.l.b16 %v174
  %v191 = vunpack.c.h.b16 %v174
  %v192 = vunpack.c.l.b16 %v175
  %v193 = vunpack.c.h.b16 %v175
  %v194 = vunpack.c.l.b16 %v176
  %v195 = vunpack.c.h.b16 %v176
  %v196 = vunpack.c.l.b16 %v177
  %v197 = vunpack.c.h.b16 %v177
  %v198 = vunpack.c.l.b16 %v178
  %v199 = vunpack.c.h.b16 %v178
  %v200 = vunpack.c.l.b16 %v179
  %v201 = vunpack.c.h.b16 %v179
  %v202 = vunpack.c.l.b16 %v180
  %v203 = vunpack.c.h.b16 %v180
  %v204 = vunpack.c.l.b16 %v181
  %v205 = vunpack.c.h.b16 %v181
  %v206 = vpack.c.b16 %v190, %v190
  %v207 = vpack.c.b16 %v191, %v191
  %v208 = vpack.c.b16 %v192, %v192
  %v209 = vpack.c.b16 %v193, %v193
  %v210 = vpack.c.b16 %v194, %v194
  %v211 = vpack.c.b16 %v195, %v195
  %v212 = vpack.c.b16 %v196, %v196
  %v213 = vpack.c.b16 %v197, %v197
  %v214 = vpack.c.b16 %v198, %v198
  %v215 = vpack.c.b16 %v199, %v199
  %v216 = vpack.c.b16 %v200, %v200
  %v217 = vpack.c.b16 %v201, %v201
  %v218 = vpack.c.b16 %v202, %v202
  %v219 = vpack.c.b16 %v203, %v203
  %v220 = vpack.c.b16 %v204, %v204
  %v221 = vpack.c.b16 %v205, %v205
  %238 = vst [vmem:[%s2] sm:$0xf] %v206
  %239 = vst [vmem:[%s2 + $0x4] sm:$0xf] %v207
  %240 = vst [vmem:[%s2 + $0x8] sm:$0xf] %v208
  %241 = vst [vmem:[%s2 + $0xc] sm:$0xf] %v209
  %242 = vst [vmem:[%s2 + $0x10] sm:$0xf] %v210
  %243 = vst [vmem:[%s2 + $0x14] sm:$0xf] %v211
  %244 = vst [vmem:[%s2 + $0x18] sm:$0xf] %v212
  %245 = vst [vmem:[%s2 + $0x1c] sm:$0xf] %v213
  %246 = vst [vmem:[%s2 + $0x20] sm:$0xf] %v214
  %247 = vst [vmem:[%s2 + $0x24] sm:$0xf] %v215
  %248 = vst [vmem:[%s2 + $0x28] sm:$0xf] %v216
  %249 = vst [vmem:[%s2 + $0x2c] sm:$0xf] %v217
  %250 = vst [vmem:[%s2 + $0x30] sm:$0xf] %v218
  %251 = vst [vmem:[%s2 + $0x34] sm:$0xf] %v219
  %252 = vst [vmem:[%s2 + $0x38] sm:$0xf] %v220
  %253 = vst [vmem:[%s2 + $0x3c] sm:$0xf] %v221
  // Predicated region
  $region10: #{graph_convolution.2} parent=0 // pred_check
    _
  $region11: #{graph_convolution.2} parent=0 // pred_check_branch
    %255 = sbr.rel (0) target = $region13
  $region12: #{graph_convolution.2} parent=0 // pred_region
    _
  $region13: #{graph_convolution.2} parent=0 // pred_fallthru
    _
  // Predicated region
  $region14: #{graph_convolution.2} parent=0 // pred_check
    _
  $region15: #{graph_convolution.2} parent=0 // pred_check_branch
    %257 = sbr.rel (0) target = $region17
  $region16: #{graph_convolution.2} parent=0 // pred_region
    _
  $region17: #{graph_convolution.2} parent=0 // pred_fallthru
    _

// kernel: graph_convolution.3
$region0: #{graph_convolution.3}
  #allocation0 [shape = 'u32[]', space=smem, size = 0x4, offset = 0x4, fixed_abs, tag = 'smem constant byte address 0x4 - core index']
  #allocation1 [shape = 'u32[144,128]{1,0:T(1,128)}', space=vmem, size = 0x12000, scoped, tag = 'internal scratch']
  %s0 = inlined_call_operand.vmem [shape: f32[128,128], index: 0, kind: input, shape index: {}]
  %s1 = inlined_call_operand.vmem [shape: bf16[128,128], index: 1, kind: input, shape index: {}]
  %s2 = inlined_call_operand.vmem [shape: f32[1,128], index: 2, kind: input, shape index: {}]
  %s3 = inlined_call_operand.vmem [shape: f32[128,128], index: 3, kind: output, shape index: {}]
  %s4 = sld [smem:[#allocation0]]
  $region53: #{graph_convolution.3} parent=0
    _
  %s6 = ssub.s32 1, %s4
  %s7 = scalar_select 0, %s6, %s4
  loop: start=0, step=1, limit=4
  $region2: #{graph_convolution.3} parent=0 // loop_pre_header
    _
  $region3: #{graph_convolution.3} parent=0 // loop_header
    %s9 = sphi 0, %s13
    %p10 = scmp.ge.s32.totalorder %s9, 4
    %s16 = sphi 0, %s28
    %s17 = sphi 0, %s24
    %s18 = sphi 0, %s16
    %s19 = sphi 0, %s17
    %s20 = sphi 0, %s18
    %s21 = sphi 0, %s19
    %s33 = sphi 0, %s35
    %s36 = sphi 0, %s33
    %s37 = sphi 0, %s36
    %s53 = sphi 0, %s37
    %s59 = sphi 0, %s61
    %s62 = sphi 0, %s59
    %s63 = sphi 0, %s62
    %s79 = sphi 0, %s63
    %s83 = sphi 0, %s83
    %s85 = sphi 0, %s83
    %s86 = sphi 0, %s85
    %s100 = sphi 0, %s86
    %s106 = sphi 0, %s108
    %s109 = sphi 0, %s106
    %s110 = sphi 0, %s109
    %s126 = sphi 0, %s110
  $region4: #{graph_convolution.3} parent=0 // loop_header_branch
    %12 = sbr.rel (%p10) target = $region8
  $region5: #{graph_convolution.3} parent=0 // loop_body
    %s14 = ssub.s32 %s9, 1
    %s15 = ssub.s32 %s9, 2
    %s22 = sadd.s32 1, %s17
    %p23 = scmp.ge.s32.totalorder %s22, 1
    %s24 = scalar_select %p23, 0, %s22
    %s25 = sadd.s32 1, %s16
    %s26 = scalar_select %p23, %s25, %s16
    %p27 = scmp.ge.s32.totalorder %s26, 2
    %s28 = scalar_select %p27, 0, %s26
    %s29 = ssub.s32 %s16, %s28
    %s30 = ssub.s32 %s17, %s24
    %s31 = sor.u32 %s29, %s30
    %p32 = scmp.eq.s32.totalorder %s31, 0
    %s34 = sadd.s32 %s33, 1
    %s35 = scalar_select %p32, %s33, %s34
    %p38 = pneg %p32
    %p39 = scmp.eq.s32.totalorder %s9, 1
    %p40 = por %p38, %p39
    %p41 = scmp.ne.s32.totalorder %s33, %s36
    %p42 = scmp.eq.s32.totalorder %s9, 0
    %p43 = por %p41, %p42
    %p44 = scmp.ne.s32.totalorder %s33, %s36
    %p45 = scmp.eq.s32.totalorder %s14, 1
    %p46 = por %p44, %p45
    %p47 = scmp.ne.s32.totalorder %s36, %s37
    %p48 = scmp.eq.s32.totalorder %s14, 0
    %p49 = por %p47, %p48
    %p50 = scmp.ne.s32.totalorder %s36, %s37
    %p51 = scmp.eq.s32.totalorder %s15, 1
    %p52 = por %p50, %p51
    %p54 = scmp.ne.s32.totalorder %s37, %s53
    %p55 = scmp.eq.s32.totalorder %s15, 0
    %p56 = por %p54, %p55
    %s57 = ssub.s32 %s17, %s24
    %p58 = scmp.eq.s32.totalorder %s57, 0
    %s60 = sadd.s32 %s59, 1
    %s61 = scalar_select %p58, %s59, %s60
    %p64 = pneg %p58
    %p65 = scmp.eq.s32.totalorder %s9, 1
    %p66 = por %p64, %p65
    %p67 = scmp.ne.s32.totalorder %s59, %s62
    %p68 = scmp.eq.s32.totalorder %s9, 0
    %p69 = por %p67, %p68
    %p70 = scmp.ne.s32.totalorder %s59, %s62
    %p71 = scmp.eq.s32.totalorder %s14, 1
    %p72 = por %p70, %p71
    %p73 = scmp.ne.s32.totalorder %s62, %s63
    %p74 = scmp.eq.s32.totalorder %s14, 0
    %p75 = por %p73, %p74
    %p76 = scmp.ne.s32.totalorder %s62, %s63
    %p77 = scmp.eq.s32.totalorder %s15, 1
    %p78 = por %p76, %p77
    %p80 = scmp.ne.s32.totalorder %s63, %s79
    %p81 = scmp.eq.s32.totalorder %s15, 0
    %p82 = por %p80, %p81
    %s84 = sadd.s32 %s83, 1
    %p87 = scmp.eq.s32.totalorder %s9, 1
    %p88 = scmp.ne.s32.totalorder %s83, %s85
    %p89 = scmp.eq.s32.totalorder %s9, 0
    %p90 = por %p88, %p89
    %p91 = scmp.ne.s32.totalorder %s83, %s85
    %p92 = scmp.eq.s32.totalorder %s14, 1
    %p93 = por %p91, %p92
    %p94 = scmp.ne.s32.totalorder %s85, %s86
    %p95 = scmp.eq.s32.totalorder %s14, 0
    %p96 = por %p94, %p95
    %p97 = scmp.ne.s32.totalorder %s85, %s86
    %p98 = scmp.eq.s32.totalorder %s15, 1
    %p99 = por %p97, %p98
    %p101 = scmp.ne.s32.totalorder %s86, %s100
    %p102 = scmp.eq.s32.totalorder %s15, 0
    %p103 = por %p101, %p102
    %s104 = ssub.s32 %s16, %s28
    %p105 = scmp.eq.s32.totalorder %s104, 0
    %s107 = sadd.s32 %s106, 1
    %s108 = scalar_select %p105, %s106, %s107
    %p111 = pneg %p105
    %p112 = scmp.eq.s32.totalorder %s9, 1
    %p113 = por %p111, %p112
    %p114 = scmp.ne.s32.totalorder %s106, %s109
    %p115 = scmp.eq.s32.totalorder %s9, 0
    %p116 = por %p114, %p115
    %p117 = scmp.ne.s32.totalorder %s106, %s109
    %p118 = scmp.eq.s32.totalorder %s14, 1
    %p119 = por %p117, %p118
    %p120 = scmp.ne.s32.totalorder %s109, %s110
    %p121 = scmp.eq.s32.totalorder %s14, 0
    %p122 = por %p120, %p121
    %p123 = scmp.ne.s32.totalorder %s109, %s110
    %p124 = scmp.eq.s32.totalorder %s15, 1
    %p125 = por %p123, %p124
    %p127 = scmp.ne.s32.totalorder %s110, %s126
    %p128 = scmp.eq.s32.totalorder %s15, 0
    %p129 = por %p127, %p128
    %p130 = scmp.le.s32.totalorder 1, %s9
    %p131 = scmp.lt.s32.totalorder %s9, 3
    %p132 = pnand %p130, %p131
    %p133 = pneg %p132
    // Predicated region
    $region9: #{graph_convolution.3} parent=5 // pred_check
      _
    $region10: #{graph_convolution.3} parent=5 // pred_check_branch
      %135 = sbr.rel (%p132) target = $region12
    $region11: #{graph_convolution.3} parent=5 // pred_region
      %s136 = ssub.s32 %s9, 1
      // Predicated region
      $region13: #{graph_convolution.3} parent=11 // pred_check
        %p137 = pneg %p75
      $region14: #{graph_convolution.3} parent=11 // pred_check_branch
        %139 = sbr.rel (%p137) target = $region16
      $region15: #{graph_convolution.3} parent=11 // pred_region
        %s140 = smul.u32 16, %s19
        %p141 = scmp.lt.s32.totalorder %s140, 15
        %s142 = scalar_select %p141, %s140, 15
        %s143 = smul.addr %s142, 4
        %s144 = scalar_lea.vmem %s1, %s143
        %s145 = smul.u32 16, %s19
      $region16: #{graph_convolution.3} parent=11 // pred_fallthru
        _
      // Predicated region
      $region17: #{graph_convolution.3} parent=11 // pred_check
        %p146 = pneg %p96
      $region18: #{graph_convolution.3} parent=11 // pred_check_branch
        %148 = sbr.rel (%p146) target = $region20
      $region19: #{graph_convolution.3} parent=11 // pred_region
        _
      $region20: #{graph_convolution.3} parent=11 // pred_fallthru
        _
    $region12: #{graph_convolution.3} parent=5 // pred_fallthru
      _
    %p149 = scmp.lt.s32.totalorder %s9, 2
    // Predicated region
    $region21: #{graph_convolution.3} parent=5 // pred_check
      %p150 = pneg %p149
    $region22: #{graph_convolution.3} parent=5 // pred_check_branch
      %152 = sbr.rel (%p150) target = $region24
    $region23: #{graph_convolution.3} parent=5 // pred_region
      // Predicated region
      $region25: #{graph_convolution.3} parent=23 // pred_check
        %p153 = pneg %p43
      $region26: #{graph_convolution.3} parent=23 // pred_check_branch
        %155 = sbr.rel (%p153) target = $region28
      $region27: #{graph_convolution.3} parent=23 // pred_region
        %s156 = smul.u32 8, %s16
        %p157 = scmp.lt.s32.totalorder %s156, 15
        %s158 = scalar_select %p157, %s156, 15
        %p159 = scmp.lt.s32.totalorder %s17, 0
        %s160 = scalar_select %p159, %s17, 0
        %s161 = sadd.s32 %s160, %s158
        %s162 = smul.addr %s161, 8
        %s163 = scalar_lea.vmem %s0, %s162
        %s164 = smul.u32 8, %s16
      $region28: #{graph_convolution.3} parent=23 // pred_fallthru
        _
    $region24: #{graph_convolution.3} parent=5 // pred_fallthru
      _
    %p165 = scmp.le.s32.totalorder 1, %s9
    %p166 = scmp.lt.s32.totalorder %s9, 3
    %p167 = pnand %p165, %p166
    %p168 = pneg %p167
    // Predicated region
    $region29: #{graph_convolution.3} parent=5 // pred_check
      _
    $region30: #{graph_convolution.3} parent=5 // pred_check_branch
      %170 = sbr.rel (%p167) target = $region32
    $region31: #{graph_convolution.3} parent=5 // pred_region
      %s171 = ssub.s32 %s9, 1
      %s172 = smul.u32 8, %s18
      %p173 = scmp.lt.s32.totalorder %s172, 15
      %s174 = scalar_select %p173, %s172, 15
      %p175 = scmp.lt.s32.totalorder %s19, 0
      %s176 = scalar_select %p175, %s19, 0
      %s177 = sadd.s32 %s176, %s174
      %s178 = smul.addr %s177, 8
      %s179 = scalar_lea.vmem %s0, %s178
      %p180 = pneg %p49
      %p181 = pneg %p46
      %s182 = smul.u32 16, %s19
      %p183 = scmp.lt.s32.totalorder %s182, 15
      %s184 = scalar_select %p183, %s182, 15
      %s185 = smul.addr %s184, 4
      %s186 = scalar_lea.vmem %s1, %s185
      %p187 = pneg %p75
      %p188 = pneg %p72
      %p189 = pneg %p96
      %p190 = pneg %p93
      %p191 = pneg %p122
      %p192 = pneg %p119
      %s193 = smul.u32 8, %s18
      %p194 = scmp.lt.s32.totalorder %s193, 15
      %s195 = scalar_select %p194, %s193, 15
      %s196 = smul.addr %s195, 8
      %s197 = scalar_lea.vmem %s3, %s196
      %s198 = smul.u32 8, %s18
      %p199 = scmp.lt.s32.totalorder %s198, 15
      %s200 = scalar_select %p199, %s198, 15
      %p201 = scmp.lt.s32.totalorder %s19, 0
      %s202 = scalar_select %p201, %s19, 0
      %s203 = sadd.s32 %s202, %s200
      %s204 = smul.addr %s203, 8
      %s205 = scalar_lea.vmem %s0, %s204
      %s206 = smul.u32 8, %s18
      %s207 = smul.u32 16, %s19
      %p208 = scmp.lt.s32.totalorder %s207, 15
      %s209 = scalar_select %p208, %s207, 15
      %s210 = smul.addr %s209, 4
      %s211 = scalar_lea.vmem %s1, %s210
      %s212 = smul.u32 16, %s19
      %s213 = smul.u32 8, %s18
      %p214 = scmp.lt.s32.totalorder %s213, 15
      %s215 = scalar_select %p214, %s213, 15
      %s216 = smul.addr %s215, 8
      %s217 = scalar_lea.vmem %s3, %s216
      %s218 = smul.u32 8, %s18
      %p220 = scmp.eq.s32.totalorder %s19, 0
      // Predicated region
      $region33: #{graph_convolution.3} parent=31 // pred_check
        %p221 = pneg %p220
      $region34: #{graph_convolution.3} parent=31 // pred_check_branch
        %223 = sbr.rel (%p221) target = $region36
      $region35: #{graph_convolution.3} parent=31 // pred_region
        %224 = vst [vmem:[%s217] sm:$0xff] 0.0
        %225 = vst [vmem:[%s217 + $0x8] sm:$0xff] 0.0
        %226 = vst [vmem:[%s217 + $0x10] sm:$0xff] 0.0
        %227 = vst [vmem:[%s217 + $0x18] sm:$0xff] 0.0
        %228 = vst [vmem:[%s217 + $0x20] sm:$0xff] 0.0
        %229 = vst [vmem:[%s217 + $0x28] sm:$0xff] 0.0
        %230 = vst [vmem:[%s217 + $0x30] sm:$0xff] 0.0
        %231 = vst [vmem:[%s217 + $0x38] sm:$0xff] 0.0
      $region36: #{graph_convolution.3} parent=31 // pred_fallthru
        _
      %v232 = vld [vmem:[%s217] sm:$0xff]
      %v233 = vld [vmem:[%s217 + $0x8] sm:$0xff]
      %v234 = vld [vmem:[%s217 + $0x10] sm:$0xff]
      %v235 = vld [vmem:[%s217 + $0x18] sm:$0xff]
      %v236 = vld [vmem:[%s217 + $0x20] sm:$0xff]
      %v237 = vld [vmem:[%s217 + $0x28] sm:$0xff]
      %v238 = vld [vmem:[%s217 + $0x30] sm:$0xff]
      %v239 = vld [vmem:[%s217 + $0x38] sm:$0xff]
      %v240 = vld [vmem:[%s205] sm:$0xff]
      %v241 = vld [vmem:[%s205 + $0x8] sm:$0xff]
      %v242 = vld [vmem:[%s205 + $0x10] sm:$0xff]
      %v243 = vld [vmem:[%s205 + $0x18] sm:$0xff]
      %v244 = vld [vmem:[%s205 + $0x20] sm:$0xff]
      %v245 = vld [vmem:[%s205 + $0x28] sm:$0xff]
      %v246 = vld [vmem:[%s205 + $0x30] sm:$0xff]
      %v247 = vld [vmem:[%s205 + $0x38] sm:$0xff]
      %v248 = vpack.c.bf16 %v241, %v240
      %v249 = vpack.c.bf16 %v243, %v242
      %v250 = vpack.c.bf16 %v245, %v244
      %v251 = vpack.c.bf16 %v247, %v246
      %v252 = vld [vmem:[%s211] sm:$0xf]
      %v253 = vld [vmem:[%s211 + $0x4] sm:$0xf]
      %v254 = vld [vmem:[%s211 + $0x8] sm:$0xf]
      %v255 = vld [vmem:[%s211 + $0xc] sm:$0xf]
      %v256 = vld [vmem:[%s211 + $0x10] sm:$0xf]
      %v257 = vld [vmem:[%s211 + $0x14] sm:$0xf]
      %v258 = vld [vmem:[%s211 + $0x18] sm:$0xf]
      %v259 = vld [vmem:[%s211 + $0x1c] sm:$0xf]
      %v260 = vld [vmem:[%s211 + $0x20] sm:$0xf]
      %v261 = vld [vmem:[%s211 + $0x24] sm:$0xf]
      %v262 = vld [vmem:[%s211 + $0x28] sm:$0xf]
      %v263 = vld [vmem:[%s211 + $0x2c] sm:$0xf]
      %v264 = vld [vmem:[%s211 + $0x30] sm:$0xf]
      %v265 = vld [vmem:[%s211 + $0x34] sm:$0xf]
      %v266 = vld [vmem:[%s211 + $0x38] sm:$0xf]
      %v267 = vld [vmem:[%s211 + $0x3c] sm:$0xf]
      %v284 = vunpack.c.l.b16 %v252
      %v285 = vunpack.c.l.b16 %v253
      %v286 = vunpack.c.l.b16 %v254
      %v287 = vunpack.c.l.b16 %v255
      %v288 = vunpack.c.l.b16 %v256
      %v289 = vunpack.c.l.b16 %v257
      %v290 = vunpack.c.l.b16 %v258
      %v291 = vunpack.c.l.b16 %v259
      %v292 = vunpack.c.l.b16 %v260
      %v293 = vunpack.c.l.b16 %v261
      %v294 = vunpack.c.l.b16 %v262
      %v295 = vunpack.c.l.b16 %v263
      %v296 = vunpack.c.l.b16 %v264
      %v297 = vunpack.c.l.b16 %v265
      %v298 = vunpack.c.l.b16 %v266
      %v299 = vunpack.c.l.b16 %v267
      %v300 = vpack.c.b16 %v285, %v284
      %v301 = vpack.c.b16 %v287, %v286
      %v302 = vpack.c.b16 %v289, %v288
      %v303 = vpack.c.b16 %v291, %v290
      %v304 = vpack.c.b16 %v293, %v292
      %v305 = vpack.c.b16 %v295, %v294
      %v306 = vpack.c.b16 %v297, %v296
      %v307 = vpack.c.b16 %v299, %v298
      %316 = vmatprep.subr.bf16.mxu0 0
      %317 = vmatpush1.bf16.msra.mxu0 %v300
      %318 = vmatprep.subr.bf16.mxu0 0
      %319 = vmatpush1.bf16.msra.mxu0 %v301
      %320 = vmatprep.subr.bf16.mxu0 0
      %321 = vmatpush1.bf16.msra.mxu0 %v302
      %322 = vmatprep.subr.bf16.mxu0 0
      %323 = vmatpush1.bf16.msra.mxu0 %v303
      %324 = vmatprep.subr.bf16.mxu0 0
      %325 = vmatpush1.bf16.msra.mxu0 %v304
      %326 = vmatprep.subr.bf16.mxu0 0
      %327 = vmatpush1.bf16.msra.mxu0 %v305
      %328 = vmatprep.subr.bf16.mxu0 0
      %329 = vmatpush1.bf16.msra.mxu0 %v306
      %330 = vmatprep.subr.bf16.mxu0 0
      %331 = vmatpush1.bf16.msra.mxu0 %v307
      %332 = vmatprep.subr.bf16.mxu0 0
      %333 = vmatpush1.bf16.msra.mxu0 0
      %334 = vmatprep.subr.bf16.mxu0 0
      %335 = vmatpush1.bf16.msra.mxu0 0
      %336 = vmatprep.subr.bf16.mxu0 0
      %337 = vmatpush1.bf16.msra.mxu0 0
      %338 = vmatprep.subr.bf16.mxu0 0
      %339 = vmatpush1.bf16.msra.mxu0 0
      %340 = vmatprep.subr.bf16.mxu0 0
      %341 = vmatpush1.bf16.msra.mxu0 0
      %342 = vmatprep.subr.bf16.mxu0 0
      %343 = vmatpush1.bf16.msra.mxu0 0
      %344 = vmatprep.subr.bf16.mxu0 0
      %345 = vmatpush1.bf16.msra.mxu0 0
      %346 = vmatprep.subr.bf16.mxu0 0
      %347 = vmatpush1.bf16.msra.mxu0 0
      %348 = vmatprep.mubr.bf16.mxu0 0
      %349 = vmatmul.mubr.bf16.gmra.mrb[0].mxu0 %v248
      %v350 = vpop.f32.mrb[0].mxu0
      %v351 = vadd.f32 0.0, %v350
      %v352 = vpop.f32.mrb[0].mxu0
      %v353 = vpop.f32.mrb[0].mxu0
      %v354 = vadd.f32 0.0, %v353
      %v355 = vpop.f32.mrb[0].mxu0
      %356 = vmatprep.mubr.bf16.mxu0 0
      %357 = vmatmul.mubr.bf16.gmra.mrb[0].mxu0 %v249
      %v358 = vpop.f32.mrb[0].mxu0
      %v359 = vadd.f32 0.0, %v358
      %v360 = vpop.f32.mrb[0].mxu0
      %v361 = vpop.f32.mrb[0].mxu0
      %v362 = vadd.f32 0.0, %v361
      %v363 = vpop.f32.mrb[0].mxu0
      %364 = vmatprep.mubr.bf16.mxu0 0
      %365 = vmatmul.mubr.bf16.gmra.mrb[0].mxu0 %v250
      %v366 = vpop.f32.mrb[0].mxu0
      %v367 = vadd.f32 0.0, %v366
      %v368 = vpop.f32.mrb[0].mxu0
      %v369 = vpop.f32.mrb[0].mxu0
      %v370 = vadd.f32 0.0, %v369
      %v371 = vpop.f32.mrb[0].mxu0
      %372 = vmatprep.mubr.bf16.mxu0 0
      %373 = vmatmul.mubr.bf16.gmra.mrb[0].mxu0 %v251
      %v374 = vpop.f32.mrb[0].mxu0
      %v375 = vadd.f32 0.0, %v374
      %v376 = vpop.f32.mrb[0].mxu0
      %v377 = vpop.f32.mrb[0].mxu0
      %v378 = vadd.f32 0.0, %v377
      %v379 = vpop.f32.mrb[0].mxu0
      %380 = vdwg.mxu0
      %v381 = vadd.f32 %v232, %v351
      %v382 = vadd.f32 %v233, %v354
      %v383 = vadd.f32 %v234, %v359
      %v384 = vadd.f32 %v235, %v362
      %v385 = vadd.f32 %v236, %v367
      %v386 = vadd.f32 %v237, %v370
      %v387 = vadd.f32 %v238, %v375
      %v388 = vadd.f32 %v239, %v378
      %389 = vst [vmem:[%s217] sm:$0xff] %v381
      %390 = vst [vmem:[%s217 + $0x8] sm:$0xff] %v382
      %391 = vst [vmem:[%s217 + $0x10] sm:$0xff] %v383
      %392 = vst [vmem:[%s217 + $0x18] sm:$0xff] %v384
      %393 = vst [vmem:[%s217 + $0x20] sm:$0xff] %v385
      %394 = vst [vmem:[%s217 + $0x28] sm:$0xff] %v386
      %395 = vst [vmem:[%s217 + $0x30] sm:$0xff] %v387
      %396 = vst [vmem:[%s217 + $0x38] sm:$0xff] %v388
      // Predicated region
      $region37: #{graph_convolution.3} parent=31 // pred_check
        %p397 = pneg %p220
      $region38: #{graph_convolution.3} parent=31 // pred_check_branch
        %399 = sbr.rel (%p397) target = $region40
      $region39: #{graph_convolution.3} parent=31 // pred_region
        %v400 = vld [vmem:[%s217] sm:$0xff]
        %v401 = vld [vmem:[%s217 + $0x8] sm:$0xff]
        %v402 = vld [vmem:[%s217 + $0x10] sm:$0xff]
        %v403 = vld [vmem:[%s217 + $0x18] sm:$0xff]
        %v404 = vld [vmem:[%s217 + $0x20] sm:$0xff]
        %v405 = vld [vmem:[%s217 + $0x28] sm:$0xff]
        %v406 = vld [vmem:[%s217 + $0x30] sm:$0xff]
        %v407 = vld [vmem:[%s217 + $0x38] sm:$0xff]
        %v408 = vld [vmem:[%s2] sm:$0x1]
        %v410 = vlaneseq
        %v411 = vshrl.u32 %v410, 7
        %v412 = vsub.s32 0, %v411
        %v413 = vrot.slane %v408, %v412
        %v415 = vadd.f32 %v400, %v413
        %v416 = vadd.f32 %v401, %v413
        %v417 = vadd.f32 %v402, %v413
        %v418 = vadd.f32 %v403, %v413
        %v419 = vadd.f32 %v404, %v413
        %v420 = vadd.f32 %v405, %v413
        %v421 = vadd.f32 %v406, %v413
        %v422 = vadd.f32 %v407, %v413
        %423 = vst [vmem:[%s217] sm:$0xff] %v415
        %424 = vst [vmem:[%s217 + $0x8] sm:$0xff] %v416
        %425 = vst [vmem:[%s217 + $0x10] sm:$0xff] %v417
        %426 = vst [vmem:[%s217 + $0x18] sm:$0xff] %v418
        %427 = vst [vmem:[%s217 + $0x20] sm:$0xff] %v419
        %428 = vst [vmem:[%s217 + $0x28] sm:$0xff] %v420
        %429 = vst [vmem:[%s217 + $0x30] sm:$0xff] %v421
        %430 = vst [vmem:[%s217 + $0x38] sm:$0xff] %v422
      $region40: #{graph_convolution.3} parent=31 // pred_fallthru
        _
      %s431 = smul.u32 8, %s18
      %p432 = scmp.lt.s32.totalorder %s431, 15
      %s433 = scalar_select %p432, %s431, 15
      %s434 = smul.addr %s433, 8
      %s435 = scalar_lea.vmem %s3, %s434
      // Predicated region
      $region41: #{graph_convolution.3} parent=31 // pred_check
        %p436 = pneg %p119
      $region42: #{graph_convolution.3} parent=31 // pred_check_branch
        %438 = sbr.rel (%p436) target = $region44
      $region43: #{graph_convolution.3} parent=31 // pred_region
        %s439 = smul.u32 8, %s18
      $region44: #{graph_convolution.3} parent=31 // pred_fallthru
        _
    $region32: #{graph_convolution.3} parent=5 // pred_fallthru
      _
    %p440 = scmp.le.s32.totalorder 2, %s9
    // Predicated region
    $region45: #{graph_convolution.3} parent=5 // pred_check
      %p441 = pneg %p440
    $region46: #{graph_convolution.3} parent=5 // pred_check_branch
      %443 = sbr.rel (%p441) target = $region48
    $region47: #{graph_convolution.3} parent=5 // pred_region
      %s444 = ssub.s32 %s9, 2
      // Predicated region
      $region49: #{graph_convolution.3} parent=47 // pred_check
        %p445 = pneg %p125
      $region50: #{graph_convolution.3} parent=47 // pred_check_branch
        %447 = sbr.rel (%p445) target = $region52
      $region51: #{graph_convolution.3} parent=47 // pred_region
        %s448 = smul.u32 8, %s20
        %p449 = scmp.lt.s32.totalorder %s448, 15
        %s450 = scalar_select %p449, %s448, 15
        %s451 = smul.addr %s450, 8
        %s452 = scalar_lea.vmem %s3, %s451
      $region52: #{graph_convolution.3} parent=47 // pred_fallthru
        _
    $region48: #{graph_convolution.3} parent=5 // pred_fallthru
      _
  $region6: #{graph_convolution.3} parent=0 // loop_footer
    %s13 = sadd.s32 1, %s9
  $region7: #{graph_convolution.3} parent=0 // loop_footer_branch
    %8 = sbr.rel target = $region3
  $region8: #{graph_convolution.3} parent=0 // loop_exit
    _

</llo_original>
